<compile_context>
chip_gen: v5e
topology: v5e:2x2
jax: 0.10.0
libtpu: 0.0.40
codegen_flags: <defaults>
</compile_context>

<pallas_src>
import functools

import jax
import jax.numpy as jnp
from jax.experimental import pallas as pl
from jax.experimental.pallas import tpu as pltpu

# Model hyper-parameters (from the PyTorch module)
batch_size = 1
hidden_size = 5
input_size = 5
num_classes = 5
num_layers = 1
sequence_length = 1

# Padded tile sizes (TPU vreg alignment: sublane=8, lane=128)
Bp = 8               # padded batch rows (sublanes)
Fp = 128             # padded feature lanes
X_OFF = 64           # lane offset where x_t is packed; h occupies lanes [0:hidden_size]
BIAS_LANE = Fp - 1   # lane carrying the constant 1.0 for the folded bias

# The lane-disjoint packing silently requires these; assert so a resized model
# does not alias the h / x / bias lanes.
assert hidden_size <= X_OFF, "hidden lanes would alias x lanes"
assert X_OFF + input_size <= BIAS_LANE, "x lanes would alias the bias-carrier lane"

# Unroll the recurrence statically for short sequences; fori_loop beyond that
# (a static Python for at large S blows up compile time / i-cache).
_UNROLL_MAX = 8


def rnn_kernel(x_ref, w_ref, out_ref):
    """Fused single-layer tanh RNN over the (static) sequence axis.

    x_ref   : (S, Bp, Fp)  packed inputs, time-major.  For real batch rows:
                lanes [X_OFF:X_OFF+I] = x_t, lane BIAS_LANE = 1.0 (bias carrier);
                step 0 additionally carries h0 in lanes [0:H].  Padded rows are 0.
    w_ref   : (Fp, Fp)     packed weights: rows [0:H] = W_hh^T,
                rows [X_OFF:X_OFF+I] = W_ih^T, row BIAS_LANE = b_ih + b_hh.
                Columns >= H are zero.
    out_ref : (S, Bp, Fp)  per-step hidden states; last step == final hidden state.

    One MXU pass per step computes h @ W_hh^T + x_t @ W_ih^T + b (bias rides on
    the augmented lane), followed by one EUP tanh.  Padded lanes/rows stay 0.
    """
    w = w_ref[...]
    S = out_ref.shape[0]

    def step(t, h):
        # h is zero outside lanes [0:H]; x_ref[t] is zero there (except step 0,
        # which carries h0 while h == 0), so the add packs (h | x_t | 1.0) into
        # one activation tile exactly.
        a = x_ref[t] + h
        h_new = jnp.tanh(jnp.dot(a, w, preferred_element_type=jnp.float32))
        out_ref[t] = h_new
        return h_new

    h = jnp.zeros(out_ref.shape[1:], jnp.float32)
    if S <= _UNROLL_MAX:
        for t in range(S):          # static unroll (S is known at trace time)
            h = step(t, h)
    else:
        jax.lax.fori_loop(0, S, step, h)
    # TODO(synk): once S*Bp*Fp*4 bytes pressures VMEM (v7x: 64 MiB physical,
    # 32 MiB scoped default -> S ~ 8K), stream x/out in fixed-size chunks via
    # pltpu.emit_pipeline (or manual double-buffered make_async_copy) instead of
    # holding the whole padded sequence resident.
    # TODO(synk): on v6e/v7x with long sequences, cast w / activations to bf16
    # (keep preferred_element_type=jnp.float32); keep f32 on v5e and on the
    # tolerance-checked path.


def init_params(key):
    """Deterministic init mirroring nn.RNN: U(-1/sqrt(H), 1/sqrt(H))."""
    k1, k2, k3, k4 = jax.random.split(key, 4)
    bound = 1.0 / jnp.sqrt(jnp.float32(hidden_size))
    w_ih = jax.random.uniform(k1, (hidden_size, input_size), jnp.float32, -bound, bound)
    w_hh = jax.random.uniform(k2, (hidden_size, hidden_size), jnp.float32, -bound, bound)
    b_ih = jax.random.uniform(k3, (hidden_size,), jnp.float32, -bound, bound)
    b_hh = jax.random.uniform(k4, (hidden_size,), jnp.float32, -bound, bound)
    return w_ih, w_hh, b_ih, b_hh


def prepare_params(params):
    """One-time packing of weights AND bias into a single MXU tile (done at init)."""
    w_ih, w_hh, b_ih, b_hh = params
    w_p = (
        jnp.zeros((Fp, Fp), jnp.float32)
        .at[:hidden_size, :hidden_size].set(w_hh.T)                 # h contribution
        .at[X_OFF:X_OFF + input_size, :hidden_size].set(w_ih.T)     # x_t contribution
        .at[BIAS_LANE, :hidden_size].set(b_ih + b_hh)               # bias (augmented row)
    )
    return w_p


@functools.partial(jax.jit, static_argnames=("use_pallas",))
def model_forward(hidden, x, w_p, use_pallas=True):
    """Equivalent of Model.forward(hidden, x) -> (hidden, out.view(-1, num_classes))."""
    S, B, I, H = sequence_length, batch_size, input_size, hidden_size

    # x.view(batch_size, sequence_length, input_size)
    x = x.reshape(B, S, I).astype(jnp.float32)
    # time-major; with B == 1 (or S == 1) the reshape is exact, no transpose needed
    x_tm = x.reshape(S, B, I) if (B == 1 or S == 1) else jnp.swapaxes(x, 0, 1)
    h0 = hidden[0].astype(jnp.float32)  # (B, H) -- num_layers == 1

    # Pack: x_t in lanes [X_OFF:X_OFF+I], 1.0 in the bias-carrier lane (real rows
    # only, so padded rows stay exactly zero), h0 folded into step 0's lanes [0:H]
    # (disjoint lane ranges, so the in-kernel add concatenates exactly).  Under jit
    # these scatters fuse with the rest of the wrapper — no extra HBM round trips.
    x_p = (
        jnp.zeros((S, Bp, Fp), jnp.float32)
        .at[:, :B, X_OFF:X_OFF + I].set(x_tm)
        .at[:, :B, BIAS_LANE].set(1.0)
        .at[0, :B, :H].set(h0)
    )

    if use_pallas:
        # ---- hot path in Pallas: one fused matmul + tanh per step, 2 inputs ----
        out_p = pl.pallas_call(
            rnn_kernel,
            out_shape=jax.ShapeDtypeStruct((S, Bp, Fp), jnp.float32),
            in_specs=[
                pl.BlockSpec(memory_space=pltpu.VMEM),
                pl.BlockSpec(memory_space=pltpu.VMEM),
            ],
            out_specs=pl.BlockSpec(memory_space=pltpu.VMEM),
        )(x_p, w_p)
    else:
        # Tiny-shape fallback: identical packed math as plain XLA ops.  For the
        # deployed shape (B=1, S=1) this avoids the custom-call launch + DMA cost.
        def scan_step(h, xt):
            h = jnp.tanh(jnp.dot(xt + h, w_p, preferred_element_type=jnp.float32))
            return h, h

        _, out_p = jax.lax.scan(scan_step, jnp.zeros((Bp, Fp), jnp.float32), x_p)

    # ---- unpad / reshape back to PyTorch shapes ----
    hidden_out = out_p[S - 1, :B, :H][None]                     # (num_layers=1, B, H)
    out = out_p[:, :B, :H]                                      # (S, B, H)
    out = out.reshape(B, S, H) if (B == 1 or S == 1) else jnp.swapaxes(out, 0, 1)
    return hidden_out, out.reshape(-1, num_classes)


def reference_forward(hidden, x, params):
    """Pure-JAX reference for correctness checking."""
    w_ih, w_hh, b_ih, b_hh = params
    x = x.reshape(batch_size, sequence_length, input_size).astype(jnp.float32)
    h = hidden[0].astype(jnp.float32)
    outs = []
    for t in range(sequence_length):
        h = jnp.tanh(x[:, t, :] @ w_ih.T + b_ih + h @ w_hh.T + b_hh)
        outs.append(h)
    out = jnp.stack(outs, axis=1)  # (B, S, H)
    return h[None], out.reshape(-1, num_classes)


if __name__ == "__main__":
    key = jax.random.PRNGKey(0)
    k_params, k_x = jax.random.split(key)

    params = init_params(k_params)
    w_p = prepare_params(params)  # one-time packing of weights + bias into one MXU tile

    # init_hidden(): zeros(num_layers, batch_size, hidden_size)
    hidden0 = jnp.zeros((num_layers, batch_size, hidden_size), jnp.float32)
    x = jax.random.normal(k_x, (batch_size, sequence_length, input_size), jnp.float32)

    # Force the Pallas path so the kernel itself is exercised (at this tiny shape a
    # deployment would gate on S/B and take the use_pallas=False XLA path instead).
    hidden_out, out = model_forward(hidden0, x, w_p, use_pallas=True)
    jax.block_until_ready((hidden_out, out))

    # sanity check against pure-JAX reference and the XLA fallback path
    h_ref, o_ref = reference_forward(hidden0, x, params)
    h_xla, o_xla = model_forward(hidden0, x, w_p, use_pallas=False)
    assert hidden_out.shape == (num_layers, batch_size, hidden_size)
    assert out.shape == (batch_size * sequence_length, num_classes)
    assert jnp.allclose(hidden_out, h_ref, atol=1e-5, rtol=1e-5)
    assert jnp.allclose(out, o_ref, atol=1e-5, rtol=1e-5)
    assert jnp.allclose(hidden_out, h_xla, atol=1e-5, rtol=1e-5)
    assert jnp.allclose(out, o_xla, atol=1e-5, rtol=1e-5)

    print("KERNEL_OK")
</pallas_src>

<mosaic_0001>
module attributes {stable_mosaic.version = 11 : i64} {
  func.func @rnn_kernel(%arg0: memref<1x8x128xf32, #tpu.memory_space<vmem>>, %arg1: memref<128x128xf32, #tpu.memory_space<vmem>>, %arg2: memref<1x8x128xf32, #tpu.memory_space<vmem>>) attributes {dimension_semantics = [], scalar_prefetch = 0 : i64, scratch_operands = 0 : i64, tpu.core_type = #tpu.core_type<tc>} {
    %c0 = arith.constant 0 : index
    %c0_0 = arith.constant 0 : index
    %0 = vector.load %arg1[%c0, %c0_0] : memref<128x128xf32, #tpu.memory_space<vmem>>, vector<128x128xf32>
    %cst = arith.constant 0.000000e+00 : f32
    %1 = vector.broadcast %cst : f32 to vector<8x128xf32>
    %c0_1 = arith.constant 0 : index
    %c0_2 = arith.constant 0 : index
    %c0_3 = arith.constant 0 : index
    %2 = vector.load %arg0[%c0_1, %c0_2, %c0_3] : memref<1x8x128xf32, #tpu.memory_space<vmem>>, vector<1x8x128xf32>
    %3 = vector.shape_cast %2 : vector<1x8x128xf32> to vector<8x128xf32>
    %4 = arith.addf %3, %1 : vector<8x128xf32>
    %cst_4 = arith.constant dense<0.000000e+00> : vector<8x128xf32>
    %5 = tpu.matmul %4, %0, %cst_4 {dimension_numbers = #tpu.dot_dimension_numbers<[1], [0], [0], [1], [0, 0, 1, 1], [], []>} : vector<8x128xf32>, vector<128x128xf32>, vector<8x128xf32> -> vector<8x128xf32>
    %6 = math.tanh %5 : vector<8x128xf32>
    %c0_5 = arith.constant 0 : index
    %c0_6 = arith.constant 0 : index
    %c0_7 = arith.constant 0 : index
    %7 = vector.load %arg2[%c0_5, %c0_6, %c0_7] : memref<1x8x128xf32, #tpu.memory_space<vmem>>, vector<1x8x128xf32>
    %8 = vector.shape_cast %7 : vector<1x8x128xf32> to vector<8x128xf32>
    %9 = vector.shape_cast %6 : vector<8x128xf32> to vector<1x8x128xf32>
    tpu.vector_store %arg2[%c0_5, %c0_6, %c0_7], %9 {strides = array<i32>} : memref<1x8x128xf32, #tpu.memory_space<vmem>>, vector<1x8x128xf32>,
    return
  }
}

</mosaic_0001>

<llo_original>
// kernel: model_forward.1
$region0: #{model_forward.1}
  #allocation0 [shape = 'u32[]', space=smem, size = 0x4, offset = 0x4, fixed_abs, tag = 'smem constant byte address 0x4 - core index']
  #allocation1 [shape = 'u32[72,128]{1,0:T(1,128)}', space=vmem, size = 0x9000, scoped, tag = 'internal scratch']
  %s0 = inlined_call_operand.vmem [shape: f32[1,8,128], index: 0, kind: input, shape index: {}]
  %s1 = inlined_call_operand.hbm [shape: f32[128,128], index: 1, kind: input, shape index: {}]
  %s2 = inlined_call_operand.vmem [shape: f32[1,8,128], index: 2, kind: output, shape index: {}]
  %s3 = sld [smem:[#allocation0]]
  $region22: #{model_forward.1} parent=0
    _
  %s5 = ssub.s32 1, %s3
  %s6 = scalar_select 0, %s5, %s3
  $region1: #{model_forward.1} parent=0
    #allocation2 [shape = 'u8[65536]{0}', space=vmem, size = 0x10000, scoped, tag = 'input window, operand 1, single buffered']
    #allocation3 [shape = 's32[1]{0}', space=sflag, size = 0x4, scoped, tag = 'scoped memory for model_forward.1']
    %7 = vsyncpa [#allocation3], 0
    // Predicated region
    $region2: #{model_forward.1} parent=1 // pred_check
      _
    $region3: #{model_forward.1} parent=1 // pred_check_branch
      %9 = sbr.rel (0) target = $region5
    $region4: #{model_forward.1} parent=1 // pred_region
      _
    $region5: #{model_forward.1} parent=1 // pred_fallthru
      _
    // Predicated region
    $region6: #{model_forward.1} parent=1 // pred_check
      _
    $region7: #{model_forward.1} parent=1 // pred_check_branch
      %11 = sbr.rel (0) target = $region9
    $region8: #{model_forward.1} parent=1 // pred_region
      %13 = vsyncadd [#allocation3], 0
      %s14 = sshll.u32 %s1, 4
      %s15 = int_to_ptr.hbm [resolvable:$true] %s14
      %s16 = sshll.u32 [#allocation2], 4
      %s17 = int_to_ptr.vmem [resolvable:$true] %s16
      %22 = dma.hbm_to_vmem [thread:$0]  %s15, 2048, %s17, [#allocation3], 128, 128, 8
    $region9: #{model_forward.1} parent=1 // pred_fallthru
      _
    // Predicated region
    $region10: #{model_forward.1} parent=1 // pred_check
      _
    $region11: #{model_forward.1} parent=1 // pred_check_branch
      %24 = sbr.rel (0) target = $region13
    $region12: #{model_forward.1} parent=1 // pred_region
      %26 = dma.done [#allocation3], 2048
    $region13: #{model_forward.1} parent=1 // pred_fallthru
      _
    %v27 = vld [vmem:[#allocation2] sm:$0xff]
    %v28 = vld [vmem:[#allocation2 + $0x8] sm:$0xff]
    %v29 = vld [vmem:[#allocation2 + $0x10] sm:$0xff]
    %v30 = vld [vmem:[#allocation2 + $0x18] sm:$0xff]
    %v31 = vld [vmem:[#allocation2 + $0x20] sm:$0xff]
    %v32 = vld [vmem:[#allocation2 + $0x28] sm:$0xff]
    %v33 = vld [vmem:[#allocation2 + $0x30] sm:$0xff]
    %v34 = vld [vmem:[#allocation2 + $0x38] sm:$0xff]
    %v35 = vld [vmem:[#allocation2 + $0x40] sm:$0xff]
    %v36 = vld [vmem:[#allocation2 + $0x48] sm:$0xff]
    %v37 = vld [vmem:[#allocation2 + $0x50] sm:$0xff]
    %v38 = vld [vmem:[#allocation2 + $0x58] sm:$0xff]
    %v39 = vld [vmem:[#allocation2 + $0x60] sm:$0xff]
    %v40 = vld [vmem:[#allocation2 + $0x68] sm:$0xff]
    %v41 = vld [vmem:[#allocation2 + $0x70] sm:$0xff]
    %v42 = vld [vmem:[#allocation2 + $0x78] sm:$0xff]
    %v43 = vld [vmem:[%s0] sm:$0xff]
    %v44 = vadd.f32 %v43, 0.0
    %45 = vmatpush.msra.mxu0 %v42
    %46 = vmatpush.msra.mxu0 %v41
    %47 = vmatpush.msra.mxu0 %v40
    %48 = vmatpush.msra.mxu0 %v39
    %49 = vmatpush.msra.mxu0 %v38
    %50 = vmatpush.msra.mxu0 %v37
    %51 = vmatpush.msra.mxu0 %v36
    %52 = vmatpush.msra.mxu0 %v35
    %53 = vmatpush.msra.mxu0 %v34
    %54 = vmatpush.msra.mxu0 %v33
    %55 = vmatpush.msra.mxu0 %v32
    %56 = vmatpush.msra.mxu0 %v31
    %57 = vmatpush.msra.mxu0 %v30
    %58 = vmatpush.msra.mxu0 %v29
    %59 = vmatpush.msra.mxu0 %v28
    %60 = vmatpush.msra.mxu0 %v27
    %61 = vmatmul.f32.gmra.mxu0 %v44
    %v62 = vpop.f32.mrf.mxu0
    %v63 = vadd.f32 0.0, %v62
    %64 = vdwg.mxu0
    %v65 = vtanh.pop %v63
    %66 = vst [vmem:[%s2] sm:$0xff] %v65
    // Predicated region
    $region14: #{model_forward.1} parent=1 // pred_check
      _
    $region15: #{model_forward.1} parent=1 // pred_check_branch
      %68 = sbr.rel (0) target = $region17
    $region16: #{model_forward.1} parent=1 // pred_region
      _
    $region17: #{model_forward.1} parent=1 // pred_fallthru
      _
    // Predicated region
    $region18: #{model_forward.1} parent=1 // pred_check
      _
    $region19: #{model_forward.1} parent=1 // pred_check_branch
      %70 = sbr.rel (0) target = $region21
    $region20: #{model_forward.1} parent=1 // pred_region
      _
    $region21: #{model_forward.1} parent=1 // pred_fallthru
      _
    %71 = vsyncpa [#allocation3], 1

</llo_original>
